<compile_context>
chip_gen: v7x
topology: tpu7x:2x2x1
jax: 0.10.0
libtpu: 0.0.40
codegen_flags: <defaults>
</compile_context>

<pallas_src>
import jax
import jax.numpy as jnp
from jax.experimental import pallas as pl
from jax.experimental.pallas import tpu as pltpu


def _make_kernel(hw_total, hw_tile, n_batch_fold, channels, needs_mask):
    """Build the kernel body; all arguments are static Python values."""
    inv_hw = 1.0 / float(hw_total)
    C = channels
    Bb = n_batch_fold

    def kernel(x1_ref, x2_ref, w1a_ref, w1b_ref, w1c_ref, w1d_ref,
               b1_ref, w2_ref, b2_ref, o_ref,
               s1_acc, s2_acc, m1_acc, m2_acc):
        t = pl.program_id(1)

        x1 = x1_ref[...].astype(jnp.float32)              # (Bb*C, T)
        x2 = x2_ref[...].astype(jnp.float32)

        if needs_mask:
            # Tail tile of a non-128-multiple HW: neutralize out-of-bounds lanes.
            lane = jax.lax.broadcasted_iota(jnp.int32, x1.shape, 1)
            valid = (t * hw_tile + lane) < hw_total
            ninf = jnp.float32(-jnp.inf)
            x1_s = jnp.where(valid, x1, 0.0)
            x2_s = jnp.where(valid, x2, 0.0)
            x1_m = jnp.where(valid, x1, ninf)
            x2_m = jnp.where(valid, x2, ninf)
        else:
            x1_s = x1_m = x1
            x2_s = x2_m = x2

        # Per-tile lane reductions -> tiny (Bb*C, 1) partials; the running
        # accumulators stay tiny so the inner loop issues ~zero vector stores.
        s1 = jnp.sum(x1_s, axis=-1, keepdims=True)
        s2 = jnp.sum(x2_s, axis=-1, keepdims=True)
        m1 = jnp.max(x1_m, axis=-1, keepdims=True)
        m2 = jnp.max(x2_m, axis=-1, keepdims=True)

        @pl.when(t == 0)
        def _init():
            s1_acc[...] = s1
            s2_acc[...] = s2
            m1_acc[...] = m1
            m2_acc[...] = m2

        @pl.when(t > 0)
        def _accumulate():
            s1_acc[...] += s1
            s2_acc[...] += s2
            m1_acc[...] = jnp.maximum(m1_acc[...], m1)
            m2_acc[...] = jnp.maximum(m2_acc[...], m2)

        @pl.when(t == pl.num_programs(1) - 1)
        def _finalize():
            w1a = w1a_ref[...]            # (C, hid) column blocks of W1
            w1b = w1b_ref[...]
            w1c = w1c_ref[...]
            w1d = w1d_ref[...]
            b1 = b1_ref[...]              # (1, hid)
            w2 = w2_ref[...]              # (2C, hid), torch layout
            b2 = b2_ref[...]              # (2C, 1)

            for bb in range(Bb):          # static unroll over folded batches
                rows = slice(bb * C, (bb + 1) * C)
                avg1 = s1_acc[rows, :] * inv_hw            # (C, 1)
                avg2 = s2_acc[rows, :] * inv_hw
                mx1 = m1_acc[rows, :]
                mx2 = m2_acc[rows, :]

                # Layer 1: relu(W1 @ [avg1; avg2; mx1; mx2] + b1) as broadcast
                # multiplies against W1's column blocks + one sublane reduce.
                prod = avg1 * w1a + avg2 * w1b + mx1 * w1c + mx2 * w1d   # (C, hid)
                h = jnp.sum(prod, axis=0, keepdims=True) + b1            # (1, hid)
                h = jnp.maximum(h, 0.0)

                # Layer 2: sigmoid(W2 @ h + b2) via one lane reduce.
                logits = jnp.sum(h * w2, axis=-1, keepdims=True) + b2    # (2C, 1)
                o_ref[bb] = jax.nn.sigmoid(logits).astype(o_ref.dtype)

    return kernel


def _vmem_limit_bytes():
    """Scoped-VMEM limit derived from the local chip, with a safe fallback."""
    cap = 64 * 1024 * 1024            # conservative default (v7x physical size)
    try:
        info = pltpu.get_tpu_info()
        cap = int(getattr(info, "vmem_capacity_bytes", cap) or cap)
    except Exception:
        pass
    # Leave headroom below physical: 128 MiB parts (v5e/v6e) -> 96 MiB,
    # 64 MiB parts (v7x) -> 40 MiB, never below 32 MiB.
    return int(max(32 * 1024 * 1024, min(cap - 24 * 1024 * 1024, 96 * 1024 * 1024)))


def _pick_batch_fold(batch, channels, itemsize):
    """Fold Bb batch elements per block so Bb*C rows fill the vreg sublanes.

    Returns the smallest divisor Bb of `batch` such that Bb*C is a multiple of
    the sublane packing (8 for f32, 16 for bf16); falls back to Bb = batch
    (full-extent row block, which is always a legal BlockSpec).
    """
    sub = max(8, 32 // max(int(itemsize), 1))
    for d in range(1, batch + 1):
        if batch % d:
            continue
        if (d * channels) % sub == 0:
            return d
    return batch


def _pick_hw_tile(hw, row_bytes, block_bytes):
    """HW tile: a multiple of 128 sized so one input block is ~block_bytes."""
    t = (block_bytes // max(row_bytes, 1)) // 128 * 128
    t = max(t, 128)
    if t >= hw:
        return hw, 1, False
    n_t = -(-hw // t)                 # ceil div
    return t, n_t, (hw % t != 0)


def prepare_params(params):
    """One-time parameter prep (hoisted out of the per-call path)."""
    w1, b1, w2, b2 = params           # torch layouts: (hid,4C), (hid,), (2C,hid), (2C,)
    hid, four_c = w1.shape
    C = four_c // 4
    w1a = jnp.transpose(w1[:, 0 * C:1 * C])   # (C, hid)  avg(x1) block
    w1b = jnp.transpose(w1[:, 1 * C:2 * C])   #           avg(x2) block
    w1c = jnp.transpose(w1[:, 2 * C:3 * C])   #           max(x1) block
    w1d = jnp.transpose(w1[:, 3 * C:4 * C])   #           max(x2) block
    b1r = b1.reshape(1, hid)
    b2c = b2.reshape(-1, 1)                   # (2C, 1)
    return (w1a, w1b, w1c, w1d, b1r, w2, b2c)


def channel_weights(x1, x2, prepared, *, block_bytes=None):
    """x1, x2: (B, C, H, W). Returns (2, B, C, 1, 1), matching the PyTorch module."""
    B, C, H, W = x1.shape
    assert x2.shape == x1.shape
    HW = H * W
    w1a, w1b, w1c, w1d, b1r, w2, b2c = prepared

    itemsize = jnp.dtype(x1.dtype).itemsize
    vmem_limit = _vmem_limit_bytes()
    if block_bytes is None:
        # ~4 MiB of one input per grid step; x1+x2 double-buffered stays <=16 MiB.
        block_bytes = min(4 * 1024 * 1024, vmem_limit // 8)

    Bb = _pick_batch_fold(B, C, itemsize)
    n_b = B // Bb
    R = Bb * C                                     # rows per input block
    T, n_t, needs_mask = _pick_hw_tile(HW, R * itemsize, block_bytes)

    # Free reshapes only (row-major NCHW -> (B*C, HW)); no transposes of the
    # big tensors.
    x1r = x1.reshape(B * C, HW)
    x2r = x2.reshape(B * C, HW)

    def full(a):
        return pl.BlockSpec(a.shape, lambda b, t: (0,) * a.ndim)

    # NOTE: for B == 1 on v7x a further ~2x is available by splitting the HW
    # reduction across the two TensorCores (two-pass partial reduce); not done.
    out = pl.pallas_call(
        _make_kernel(HW, T, Bb, C, needs_mask),
        out_shape=jax.ShapeDtypeStruct((B, 2 * C, 1), x1.dtype),
        grid_spec=pltpu.PrefetchScalarGridSpec(
            num_scalar_prefetch=0,
            grid=(n_b, n_t),
            in_specs=[
                pl.BlockSpec((R, T), lambda b, t: (b, t)),   # x1 row block
                pl.BlockSpec((R, T), lambda b, t: (b, t)),   # x2 row block
                full(w1a), full(w1b), full(w1c), full(w1d),
                full(b1r), full(w2), full(b2c),
            ],
            out_specs=pl.BlockSpec((Bb, 2 * C, 1), lambda b, t: (b, 0, 0)),
            scratch_shapes=[pltpu.VMEM((R, 1), jnp.float32) for _ in range(4)],
        ),
        compiler_params=pltpu.CompilerParams(
            dimension_semantics=("parallel", "arbitrary"),
            vmem_limit_bytes=vmem_limit),
    )(x1r, x2r, w1a, w1b, w1c, w1d, b1r, w2, b2c)

    # (B, 2C, 1) -> (B, 2, C, 1, 1) -> (2, B, C, 1, 1)   (tiny tensor)
    return jnp.transpose(out.reshape(B, 2, C, 1, 1), (1, 0, 2, 3, 4))


def init_params(key, dim, reduction=1, dtype=jnp.float32):
    """Synthetic parameters mirroring the PyTorch module shapes (torch layouts)."""
    hid = (dim * 4) // reduction
    k = jax.random.split(key, 4)
    w1 = jax.random.normal(k[0], (hid, dim * 4), dtype) * 0.25
    b1 = jax.random.normal(k[1], (hid,), dtype) * 0.1
    w2 = jax.random.normal(k[2], (dim * 2, hid), dtype) * 0.25
    b2 = jax.random.normal(k[3], (dim * 2,), dtype) * 0.1
    return (w1, b1, w2, b2)


def _reference(x1, x2, params):
    """Pure-JAX reference matching the PyTorch forward."""
    w1, b1, w2, b2 = params
    B, C, H, W = x1.shape
    cat = jnp.concatenate([x1, x2], axis=1).astype(jnp.float32)   # (B, 2C, H, W)
    avg = jnp.mean(cat, axis=(2, 3))                              # (B, 2C)
    mx = jnp.max(cat, axis=(2, 3))                                # (B, 2C)
    feat = jnp.concatenate([avg, mx], axis=1)                     # (B, 4C)
    h = jnp.maximum(feat @ w1.T + b1, 0.0)
    out = jax.nn.sigmoid(h @ w2.T + b2)                           # (B, 2C)
    out = out.reshape(B, 2, C, 1, 1)
    return jnp.transpose(out, (1, 0, 2, 3, 4))                    # (2, B, C, 1, 1)


if __name__ == "__main__":
    B, C, H, W = 2, 4, 16, 16
    key = jax.random.PRNGKey(0)
    k1, k2, kp = jax.random.split(key, 3)
    x1 = jax.random.normal(k1, (B, C, H, W), jnp.float32)
    x2 = jax.random.normal(k2, (B, C, H, W), jnp.float32)
    params = init_params(kp, dim=C, reduction=1)
    prepared = prepare_params(params)

    # Small block budget so this test exercises the multi-tile accumulation
    # path (HW=256 -> two 128-wide tiles) and batch folding (Bb=2, 8 rows);
    # production calls use the default (~4 MiB per input block).
    out = channel_weights(x1, x2, prepared, block_bytes=4096)
    out = jax.block_until_ready(out)

    ref = _reference(x1, x2, params)
    assert out.shape == (2, B, C, 1, 1), out.shape
    err = float(jnp.max(jnp.abs(out.astype(jnp.float32) - ref)))
    assert err < 1e-4, err
    print("KERNEL_OK")
</pallas_src>

<mosaic_0001>
module attributes {stable_mosaic.version = 11 : i64} {
  func.func @kernel(%arg0: i32, %arg1: i32, %arg2: memref<8x128xf32, #tpu.memory_space<vmem>>, %arg3: memref<8x128xf32, #tpu.memory_space<vmem>>, %arg4: memref<4x16xf32, #tpu.memory_space<vmem>>, %arg5: memref<4x16xf32, #tpu.memory_space<vmem>>, %arg6: memref<4x16xf32, #tpu.memory_space<vmem>>, %arg7: memref<4x16xf32, #tpu.memory_space<vmem>>, %arg8: memref<1x16xf32, #tpu.memory_space<vmem>>, %arg9: memref<8x16xf32, #tpu.memory_space<vmem>>, %arg10: memref<8x1xf32, #tpu.memory_space<vmem>>, %arg11: memref<2x8x1xf32, #tpu.memory_space<vmem>>, %arg12: memref<8x1xf32, #tpu.memory_space<vmem>>, %arg13: memref<8x1xf32, #tpu.memory_space<vmem>>, %arg14: memref<8x1xf32, #tpu.memory_space<vmem>>, %arg15: memref<8x1xf32, #tpu.memory_space<vmem>>) attributes {dimension_semantics = [#tpu.dimension_semantics<parallel>, #tpu.dimension_semantics<arbitrary>], iteration_bounds = array<i64: 1, 2>, scalar_prefetch = 0 : i64, scratch_operands = 4 : i64, tpu.core_type = #tpu.core_type<tc>, window_params = [{transform_indices = @transform_0, window_bounds = array<i64: 8, 128>}, {transform_indices = @transform_1, window_bounds = array<i64: 8, 128>}, {pipeline_mode = #tpu.pipeline_mode<synchronous>, transform_indices = @transform_2, window_bounds = array<i64: 4, 16>}, {pipeline_mode = #tpu.pipeline_mode<synchronous>, transform_indices = @transform_3, window_bounds = array<i64: 4, 16>}, {pipeline_mode = #tpu.pipeline_mode<synchronous>, transform_indices = @transform_4, window_bounds = array<i64: 4, 16>}, {pipeline_mode = #tpu.pipeline_mode<synchronous>, transform_indices = @transform_5, window_bounds = array<i64: 4, 16>}, {pipeline_mode = #tpu.pipeline_mode<synchronous>, transform_indices = @transform_6, window_bounds = array<i64: 1, 16>}, {pipeline_mode = #tpu.pipeline_mode<synchronous>, transform_indices = @transform_7, window_bounds = array<i64: 8, 16>}, {pipeline_mode = #tpu.pipeline_mode<synchronous>, transform_indices = @transform_8, window_bounds = array<i64: 8, 1>}, {transform_indices = @transform_9, window_bounds = array<i64: 2, 8, 1>}]} {
    %c0 = arith.constant 0 : index
    %c0_0 = arith.constant 0 : index
    %0 = vector.load %arg2[%c0, %c0_0] : memref<8x128xf32, #tpu.memory_space<vmem>>, vector<8x128xf32>
    %c0_1 = arith.constant 0 : index
    %c0_2 = arith.constant 0 : index
    %1 = vector.load %arg3[%c0_1, %c0_2] : memref<8x128xf32, #tpu.memory_space<vmem>>, vector<8x128xf32>
    %cst = arith.constant dense<0.000000e+00> : vector<8xf32>
    %2 = vector.multi_reduction <add>, %0, %cst [1] : vector<8x128xf32> to vector<8xf32>
    %3 = vector.shape_cast %2 : vector<8xf32> to vector<8x1xf32>
    %cst_3 = arith.constant dense<0.000000e+00> : vector<8xf32>
    %4 = vector.multi_reduction <add>, %1, %cst_3 [1] : vector<8x128xf32> to vector<8xf32>
    %5 = vector.shape_cast %4 : vector<8xf32> to vector<8x1xf32>
    %cst_4 = arith.constant dense<0xFF800000> : vector<8xf32>
    %6 = vector.multi_reduction <maximumf>, %0, %cst_4 [1] : vector<8x128xf32> to vector<8xf32>
    %7 = vector.shape_cast %6 : vector<8xf32> to vector<8x1xf32>
    %cst_5 = arith.constant dense<0xFF800000> : vector<8xf32>
    %8 = vector.multi_reduction <maximumf>, %1, %cst_5 [1] : vector<8x128xf32> to vector<8xf32>
    %9 = vector.shape_cast %8 : vector<8xf32> to vector<8x1xf32>
    %c0_i32 = arith.constant 0 : i32
    %10 = arith.cmpi eq, %arg1, %c0_i32 : i32
    %11 = arith.extui %10 : i1 to i32
    %c0_i32_6 = arith.constant 0 : i32
    %12 = arith.cmpi ne, %11, %c0_i32_6 : i32
    scf.if %12 {
      %c0_10 = arith.constant 0 : index
      %c0_11 = arith.constant 0 : index
      %19 = vector.load %arg12[%c0_10, %c0_11] : memref<8x1xf32, #tpu.memory_space<vmem>>, vector<8x1xf32>
      tpu.vector_store %arg12[%c0_10, %c0_11], %3 {strides = array<i32>} : memref<8x1xf32, #tpu.memory_space<vmem>>, vector<8x1xf32>,
      %c0_12 = arith.constant 0 : index
      %c0_13 = arith.constant 0 : index
      %20 = vector.load %arg13[%c0_12, %c0_13] : memref<8x1xf32, #tpu.memory_space<vmem>>, vector<8x1xf32>
      tpu.vector_store %arg13[%c0_12, %c0_13], %5 {strides = array<i32>} : memref<8x1xf32, #tpu.memory_space<vmem>>, vector<8x1xf32>,
      %c0_14 = arith.constant 0 : index
      %c0_15 = arith.constant 0 : index
      %21 = vector.load %arg14[%c0_14, %c0_15] : memref<8x1xf32, #tpu.memory_space<vmem>>, vector<8x1xf32>
      tpu.vector_store %arg14[%c0_14, %c0_15], %7 {strides = array<i32>} : memref<8x1xf32, #tpu.memory_space<vmem>>, vector<8x1xf32>,
      %c0_16 = arith.constant 0 : index
      %c0_17 = arith.constant 0 : index
      %22 = vector.load %arg15[%c0_16, %c0_17] : memref<8x1xf32, #tpu.memory_space<vmem>>, vector<8x1xf32>
      tpu.vector_store %arg15[%c0_16, %c0_17], %9 {strides = array<i32>} : memref<8x1xf32, #tpu.memory_space<vmem>>, vector<8x1xf32>,
    } else {
    }
    %c0_i32_7 = arith.constant 0 : i32
    %13 = arith.cmpi sgt, %arg1, %c0_i32_7 : i32
    %14 = arith.extui %13 : i1 to i32
    %c0_i32_8 = arith.constant 0 : i32
    %15 = arith.cmpi ne, %14, %c0_i32_8 : i32
    scf.if %15 {
      %c0_10 = arith.constant 0 : index
      %c0_11 = arith.constant 0 : index
      %19 = vector.load %arg12[%c0_10, %c0_11] : memref<8x1xf32, #tpu.memory_space<vmem>>, vector<8x1xf32>
      %20 = arith.addf %19, %3 : vector<8x1xf32>
      %c0_12 = arith.constant 0 : index
      %c0_13 = arith.constant 0 : index
      %21 = vector.load %arg12[%c0_12, %c0_13] : memref<8x1xf32, #tpu.memory_space<vmem>>, vector<8x1xf32>
      tpu.vector_store %arg12[%c0_12, %c0_13], %20 {strides = array<i32>} : memref<8x1xf32, #tpu.memory_space<vmem>>, vector<8x1xf32>,
      %c0_14 = arith.constant 0 : index
      %c0_15 = arith.constant 0 : index
      %22 = vector.load %arg13[%c0_14, %c0_15] : memref<8x1xf32, #tpu.memory_space<vmem>>, vector<8x1xf32>
      %23 = arith.addf %22, %5 : vector<8x1xf32>
      %c0_16 = arith.constant 0 : index
      %c0_17 = arith.constant 0 : index
      %24 = vector.load %arg13[%c0_16, %c0_17] : memref<8x1xf32, #tpu.memory_space<vmem>>, vector<8x1xf32>
      tpu.vector_store %arg13[%c0_16, %c0_17], %23 {strides = array<i32>} : memref<8x1xf32, #tpu.memory_space<vmem>>, vector<8x1xf32>,
      %c0_18 = arith.constant 0 : index
      %c0_19 = arith.constant 0 : index
      %25 = vector.load %arg14[%c0_18, %c0_19] : memref<8x1xf32, #tpu.memory_space<vmem>>, vector<8x1xf32>
      %26 = arith.maximumf %25, %7 : vector<8x1xf32>
      %c0_20 = arith.constant 0 : index
      %c0_21 = arith.constant 0 : index
      %27 = vector.load %arg14[%c0_20, %c0_21] : memref<8x1xf32, #tpu.memory_space<vmem>>, vector<8x1xf32>
      tpu.vector_store %arg14[%c0_20, %c0_21], %26 {strides = array<i32>} : memref<8x1xf32, #tpu.memory_space<vmem>>, vector<8x1xf32>,
      %c0_22 = arith.constant 0 : index
      %c0_23 = arith.constant 0 : index
      %28 = vector.load %arg15[%c0_22, %c0_23] : memref<8x1xf32, #tpu.memory_space<vmem>>, vector<8x1xf32>
      %29 = arith.maximumf %28, %9 : vector<8x1xf32>
      %c0_24 = arith.constant 0 : index
      %c0_25 = arith.constant 0 : index
      %30 = vector.load %arg15[%c0_24, %c0_25] : memref<8x1xf32, #tpu.memory_space<vmem>>, vector<8x1xf32>
      tpu.vector_store %arg15[%c0_24, %c0_25], %29 {strides = array<i32>} : memref<8x1xf32, #tpu.memory_space<vmem>>, vector<8x1xf32>,
    } else {
    }
    %c1_i32 = arith.constant 1 : i32
    %16 = arith.cmpi eq, %arg1, %c1_i32 : i32
    %17 = arith.extui %16 : i1 to i32
    %c0_i32_9 = arith.constant 0 : i32
    %18 = arith.cmpi ne, %17, %c0_i32_9 : i32
    scf.if %18 {
      %c0_10 = arith.constant 0 : index
      %c0_11 = arith.constant 0 : index
      %19 = vector.load %arg4[%c0_10, %c0_11] : memref<4x16xf32, #tpu.memory_space<vmem>>, vector<4x16xf32>
      %c0_12 = arith.constant 0 : index
      %c0_13 = arith.constant 0 : index
      %20 = vector.load %arg5[%c0_12, %c0_13] : memref<4x16xf32, #tpu.memory_space<vmem>>, vector<4x16xf32>
      %c0_14 = arith.constant 0 : index
      %c0_15 = arith.constant 0 : index
      %21 = vector.load %arg6[%c0_14, %c0_15] : memref<4x16xf32, #tpu.memory_space<vmem>>, vector<4x16xf32>
      %c0_16 = arith.constant 0 : index
      %c0_17 = arith.constant 0 : index
      %22 = vector.load %arg7[%c0_16, %c0_17] : memref<4x16xf32, #tpu.memory_space<vmem>>, vector<4x16xf32>
      %c0_18 = arith.constant 0 : index
      %c0_19 = arith.constant 0 : index
      %23 = vector.load %arg8[%c0_18, %c0_19] : memref<1x16xf32, #tpu.memory_space<vmem>>, vector<1x16xf32>
      %c0_20 = arith.constant 0 : index
      %c0_21 = arith.constant 0 : index
      %24 = vector.load %arg9[%c0_20, %c0_21] : memref<8x16xf32, #tpu.memory_space<vmem>>, vector<8x16xf32>
      %c0_22 = arith.constant 0 : index
      %c0_23 = arith.constant 0 : index
      %25 = vector.load %arg10[%c0_22, %c0_23] : memref<8x1xf32, #tpu.memory_space<vmem>>, vector<8x1xf32>
      %c0_24 = arith.constant 0 : index
      %c0_25 = arith.constant 0 : index
      %26 = vector.load %arg12[%c0_24, %c0_25] : memref<8x1xf32, #tpu.memory_space<vmem>>, vector<4x1xf32>
      %cst_26 = arith.constant 3.906250e-03 : f32
      %27 = vector.broadcast %cst_26 : f32 to vector<4x1xf32>
      %28 = arith.mulf %26, %27 : vector<4x1xf32>
      %c0_27 = arith.constant 0 : index
      %c0_28 = arith.constant 0 : index
      %29 = vector.load %arg13[%c0_27, %c0_28] : memref<8x1xf32, #tpu.memory_space<vmem>>, vector<4x1xf32>
      %cst_29 = arith.constant 3.906250e-03 : f32
      %30 = vector.broadcast %cst_29 : f32 to vector<4x1xf32>
      %31 = arith.mulf %29, %30 : vector<4x1xf32>
      %c0_30 = arith.constant 0 : index
      %c0_31 = arith.constant 0 : index
      %32 = vector.load %arg14[%c0_30, %c0_31] : memref<8x1xf32, #tpu.memory_space<vmem>>, vector<4x1xf32>
      %c0_32 = arith.constant 0 : index
      %c0_33 = arith.constant 0 : index
      %33 = vector.load %arg15[%c0_32, %c0_33] : memref<8x1xf32, #tpu.memory_space<vmem>>, vector<4x1xf32>
      %34 = vector.broadcast %28 : vector<4x1xf32> to vector<4x16xf32>
      %35 = arith.mulf %34, %19 : vector<4x16xf32>
      %36 = vector.broadcast %31 : vector<4x1xf32> to vector<4x16xf32>
      %37 = arith.mulf %36, %20 : vector<4x16xf32>
      %38 = arith.addf %35, %37 : vector<4x16xf32>
      %39 = vector.broadcast %32 : vector<4x1xf32> to vector<4x16xf32>
      %40 = arith.mulf %39, %21 : vector<4x16xf32>
      %41 = arith.addf %38, %40 : vector<4x16xf32>
      %42 = vector.broadcast %33 : vector<4x1xf32> to vector<4x16xf32>
      %43 = arith.mulf %42, %22 : vector<4x16xf32>
      %44 = arith.addf %41, %43 : vector<4x16xf32>
      %cst_34 = arith.constant dense<0.000000e+00> : vector<16xf32>
      %45 = vector.multi_reduction <add>, %44, %cst_34 [0] : vector<4x16xf32> to vector<16xf32>
      %46 = vector.shape_cast %45 : vector<16xf32> to vector<1x16xf32>
      %47 = arith.addf %46, %23 : vector<1x16xf32>
      %cst_35 = arith.constant 0.000000e+00 : f32
      %48 = vector.broadcast %cst_35 : f32 to vector<1x16xf32>
      %49 = arith.maximumf %47, %48 : vector<1x16xf32>
      %50 = vector.broadcast %49 : vector<1x16xf32> to vector<8x16xf32>
      %51 = arith.mulf %50, %24 : vector<8x16xf32>
      %cst_36 = arith.constant dense<0.000000e+00> : vector<8xf32>
      %52 = vector.multi_reduction <add>, %51, %cst_36 [1] : vector<8x16xf32> to vector<8xf32>
      %53 = vector.shape_cast %52 : vector<8xf32> to vector<8x1xf32>
      %54 = arith.addf %53, %25 : vector<8x1xf32>
      %55 = arith.negf %54 : vector<8x1xf32>
      %56 = math.exp %55 : vector<8x1xf32>
      %cst_37 = arith.constant 1.000000e+00 : f32
      %57 = vector.broadcast %cst_37 : f32 to vector<8x1xf32>
      %58 = arith.addf %57, %56 : vector<8x1xf32>
      %59 = arith.divf %57, %58 : vector<8x1xf32>
      %c0_38 = arith.constant 0 : index
      %c0_39 = arith.constant 0 : index
      %c0_40 = arith.constant 0 : index
      %60 = vector.load %arg11[%c0_38, %c0_39, %c0_40] : memref<2x8x1xf32, #tpu.memory_space<vmem>>, vector<1x8x1xf32>
      %61 = vector.shape_cast %60 : vector<1x8x1xf32> to vector<8x1xf32>
      %62 = vector.shape_cast %59 : vector<8x1xf32> to vector<1x8x1xf32>
      tpu.vector_store %arg11[%c0_38, %c0_39, %c0_40], %62 {strides = array<i32>} : memref<2x8x1xf32, #tpu.memory_space<vmem>>, vector<1x8x1xf32>,
      %c4 = arith.constant 4 : index
      %c0_41 = arith.constant 0 : index
      %63 = vector.load %arg12[%c4, %c0_41] : memref<8x1xf32, #tpu.memory_space<vmem>>, vector<4x1xf32>
      %cst_42 = arith.constant 3.906250e-03 : f32
      %64 = vector.broadcast %cst_42 : f32 to vector<4x1xf32>
      %65 = arith.mulf %63, %64 : vector<4x1xf32>
      %c4_43 = arith.constant 4 : index
      %c0_44 = arith.constant 0 : index
      %66 = vector.load %arg13[%c4_43, %c0_44] : memref<8x1xf32, #tpu.memory_space<vmem>>, vector<4x1xf32>
      %cst_45 = arith.constant 3.906250e-03 : f32
      %67 = vector.broadcast %cst_45 : f32 to vector<4x1xf32>
      %68 = arith.mulf %66, %67 : vector<4x1xf32>
      %c4_46 = arith.constant 4 : index
      %c0_47 = arith.constant 0 : index
      %69 = vector.load %arg14[%c4_46, %c0_47] : memref<8x1xf32, #tpu.memory_space<vmem>>, vector<4x1xf32>
      %c4_48 = arith.constant 4 : index
      %c0_49 = arith.constant 0 : index
      %70 = vector.load %arg15[%c4_48, %c0_49] : memref<8x1xf32, #tpu.memory_space<vmem>>, vector<4x1xf32>
      %71 = vector.broadcast %65 : vector<4x1xf32> to vector<4x16xf32>
      %72 = arith.mulf %71, %19 : vector<4x16xf32>
      %73 = vector.broadcast %68 : vector<4x1xf32> to vector<4x16xf32>
      %74 = arith.mulf %73, %20 : vector<4x16xf32>
      %75 = arith.addf %72, %74 : vector<4x16xf32>
      %76 = vector.broadcast %69 : vector<4x1xf32> to vector<4x16xf32>
      %77 = arith.mulf %76, %21 : vector<4x16xf32>
      %78 = arith.addf %75, %77 : vector<4x16xf32>
      %79 = vector.broadcast %70 : vector<4x1xf32> to vector<4x16xf32>
      %80 = arith.mulf %79, %22 : vector<4x16xf32>
      %81 = arith.addf %78, %80 : vector<4x16xf32>
      %cst_50 = arith.constant dense<0.000000e+00> : vector<16xf32>
      %82 = vector.multi_reduction <add>, %81, %cst_50 [0] : vector<4x16xf32> to vector<16xf32>
      %83 = vector.shape_cast %82 : vector<16xf32> to vector<1x16xf32>
      %84 = arith.addf %83, %23 : vector<1x16xf32>
      %cst_51 = arith.constant 0.000000e+00 : f32
      %85 = vector.broadcast %cst_51 : f32 to vector<1x16xf32>
      %86 = arith.maximumf %84, %85 : vector<1x16xf32>
      %87 = vector.broadcast %86 : vector<1x16xf32> to vector<8x16xf32>
      %88 = arith.mulf %87, %24 : vector<8x16xf32>
      %cst_52 = arith.constant dense<0.000000e+00> : vector<8xf32>
      %89 = vector.multi_reduction <add>, %88, %cst_52 [1] : vector<8x16xf32> to vector<8xf32>
      %90 = vector.shape_cast %89 : vector<8xf32> to vector<8x1xf32>
      %91 = arith.addf %90, %25 : vector<8x1xf32>
      %92 = arith.negf %91 : vector<8x1xf32>
      %93 = math.exp %92 : vector<8x1xf32>
      %cst_53 = arith.constant 1.000000e+00 : f32
      %94 = vector.broadcast %cst_53 : f32 to vector<8x1xf32>
      %95 = arith.addf %94, %93 : vector<8x1xf32>
      %96 = arith.divf %94, %95 : vector<8x1xf32>
      %c1 = arith.constant 1 : index
      %c0_54 = arith.constant 0 : index
      %c0_55 = arith.constant 0 : index
      %97 = vector.load %arg11[%c1, %c0_54, %c0_55] : memref<2x8x1xf32, #tpu.memory_space<vmem>>, vector<1x8x1xf32>
      %98 = vector.shape_cast %97 : vector<1x8x1xf32> to vector<8x1xf32>
      %99 = vector.shape_cast %96 : vector<8x1xf32> to vector<1x8x1xf32>
      tpu.vector_store %arg11[%c1, %c0_54, %c0_55], %99 {strides = array<i32>} : memref<2x8x1xf32, #tpu.memory_space<vmem>>, vector<1x8x1xf32>,
    } else {
    }
    return
  }
  func.func @transform_0(%arg0: i32, %arg1: i32) -> (i32, i32) {
    %c0_i32 = arith.constant 0 : i32
    return %arg0, %arg1 : i32, i32
  }
  func.func @transform_1(%arg0: i32, %arg1: i32) -> (i32, i32) {
    %c0_i32 = arith.constant 0 : i32
    return %arg0, %arg1 : i32, i32
  }
  func.func @transform_2(%arg0: i32, %arg1: i32) -> (i32, i32) {
    %c0_i32 = arith.constant 0 : i32
    %c0_i32_0 = arith.constant 0 : i32
    %c0_i32_1 = arith.constant 0 : i32
    return %c0_i32, %c0_i32_0 : i32, i32
  }
  func.func @transform_3(%arg0: i32, %arg1: i32) -> (i32, i32) {
    %c0_i32 = arith.constant 0 : i32
    %c0_i32_0 = arith.constant 0 : i32
    %c0_i32_1 = arith.constant 0 : i32
    return %c0_i32, %c0_i32_0 : i32, i32
  }
  func.func @transform_4(%arg0: i32, %arg1: i32) -> (i32, i32) {
    %c0_i32 = arith.constant 0 : i32
    %c0_i32_0 = arith.constant 0 : i32
    %c0_i32_1 = arith.constant 0 : i32
    return %c0_i32, %c0_i32_0 : i32, i32
  }
  func.func @transform_5(%arg0: i32, %arg1: i32) -> (i32, i32) {
    %c0_i32 = arith.constant 0 : i32
    %c0_i32_0 = arith.constant 0 : i32
    %c0_i32_1 = arith.constant 0 : i32
    return %c0_i32, %c0_i32_0 : i32, i32
  }
  func.func @transform_6(%arg0: i32, %arg1: i32) -> (i32, i32) {
    %c0_i32 = arith.constant 0 : i32
    %c0_i32_0 = arith.constant 0 : i32
    %c0_i32_1 = arith.constant 0 : i32
    return %c0_i32, %c0_i32_0 : i32, i32
  }
  func.func @transform_7(%arg0: i32, %arg1: i32) -> (i32, i32) {
    %c0_i32 = arith.constant 0 : i32
    %c0_i32_0 = arith.constant 0 : i32
    %c0_i32_1 = arith.constant 0 : i32
    return %c0_i32, %c0_i32_0 : i32, i32
  }
  func.func @transform_8(%arg0: i32, %arg1: i32) -> (i32, i32) {
    %c0_i32 = arith.constant 0 : i32
    %c0_i32_0 = arith.constant 0 : i32
    %c0_i32_1 = arith.constant 0 : i32
    return %c0_i32, %c0_i32_0 : i32, i32
  }
  func.func @transform_9(%arg0: i32, %arg1: i32) -> (i32, i32, i32) {
    %c0_i32 = arith.constant 0 : i32
    %c0_i32_0 = arith.constant 0 : i32
    %c0_i32_1 = arith.constant 0 : i32
    return %arg0, %c0_i32, %c0_i32_0 : i32, i32, i32
  }
}

</mosaic_0001>

<llo_original>
// kernel: tpu_custom_call.1
$region0: #{tpu_custom_call.1}
  #allocation0 [shape = 'u32[]', space=smem, size = 0x4, offset = 0x4, fixed_abs, tag = 'smem constant byte address 0x4 - core index']
  #allocation1 [shape = 'u32[144,128]{1,0:T(1,128)}', space=vmem, size = 0x12000, scoped, tag = 'internal scratch']
  #allocation2 [shape = 'f32[8,1]{1,0:T(8,128)}', space=vmem, size = 0x1000, scoped, tag = 'scratch operand']
  #allocation3 [shape = 'f32[8,1]{1,0:T(8,128)}', space=vmem, size = 0x1000, scoped, tag = 'scratch operand']
  #allocation4 [shape = 'f32[8,1]{1,0:T(8,128)}', space=vmem, size = 0x1000, scoped, tag = 'scratch operand']
  #allocation5 [shape = 'f32[8,1]{1,0:T(8,128)}', space=vmem, size = 0x1000, scoped, tag = 'scratch operand']
  %s0 = inlined_call_operand.hbm [shape: f32[8,256], index: 0, kind: input, shape index: {}]
  %s1 = inlined_call_operand.hbm [shape: f32[8,256], index: 1, kind: input, shape index: {}]
  %s2 = inlined_call_operand.vmem [shape: f32[4,16], index: 2, kind: input, shape index: {}]
  %s3 = inlined_call_operand.vmem [shape: f32[4,16], index: 3, kind: input, shape index: {}]
  %s4 = inlined_call_operand.vmem [shape: f32[4,16], index: 4, kind: input, shape index: {}]
  %s5 = inlined_call_operand.vmem [shape: f32[4,16], index: 5, kind: input, shape index: {}]
  %s6 = inlined_call_operand.vmem [shape: f32[1,16], index: 6, kind: input, shape index: {}]
  %s7 = inlined_call_operand.vmem [shape: f32[8,16], index: 7, kind: input, shape index: {}]
  %s8 = inlined_call_operand.vmem [shape: f32[8,1], index: 8, kind: input, shape index: {}]
  %s9 = inlined_call_operand.vmem [shape: f32[2,8,1], index: 9, kind: output, shape index: {}]
  %s10 = sld [smem:[#allocation0]]
  $region89: #{tpu_custom_call.1} parent=0
    _
  %s12 = ssub.s32 1, %s10
  %s13 = scalar_select 0, %s12, %s10
  $region1: #{tpu_custom_call.1} parent=0
    #allocation6 [shape = 'u8[8192]{0}', space=vmem, size = 0x2000, scoped, tag = 'input window, operand 0']
    #allocation7 [shape = 's32[2]{0}', space=sflag, size = 0x8, scoped, tag = 'scoped memory for tpu_custom_call.1']
    #allocation8 [shape = 'u8[8192]{0}', space=vmem, size = 0x2000, scoped, tag = 'input window, operand 1']
    #allocation9 [shape = 's32[2]{0}', space=sflag, size = 0x8, scoped, tag = 'scoped memory for tpu_custom_call.1']
    %14 = vsyncpa [#allocation7], 0
    %s15 = scalar_lea.sflag [#allocation7], 1
    %16 = vsyncpa %s15, 0
    %17 = vsyncpa [#allocation9], 0
    %s18 = scalar_lea.sflag [#allocation9], 1
    %19 = vsyncpa %s18, 0
    loop: start=0, step=1, limit=4
    $region2: #{tpu_custom_call.1} parent=1 // loop_pre_header
      _
    $region3: #{tpu_custom_call.1} parent=1 // loop_header
      %s21 = sphi 0, %s25
      %p22 = scmp.ge.s32.totalorder %s21, 4
      %s28 = sphi 0, %s40
      %s29 = sphi 0, %s36
      %s30 = sphi 0, %s28
      %s31 = sphi 0, %s29
      %s32 = sphi 0, %s30
      %s33 = sphi 0, %s31
      %s45 = sphi 0, %s47
      %s48 = sphi 0, %s45
      %s49 = sphi 0, %s48
      %s65 = sphi 0, %s49
      %s73 = sphi 0, %s75
      %s76 = sphi 0, %s73
      %s77 = sphi 0, %s76
      %s93 = sphi 0, %s77
      %s97 = sphi 0, %s97
      %s99 = sphi 0, %s97
      %s100 = sphi 0, %s99
      %s114 = sphi 0, %s100
      %s118 = sphi 0, %s118
      %s120 = sphi 0, %s118
      %s121 = sphi 0, %s120
      %s135 = sphi 0, %s121
      %s139 = sphi 0, %s139
      %s141 = sphi 0, %s139
      %s142 = sphi 0, %s141
      %s156 = sphi 0, %s142
      %s160 = sphi 0, %s160
      %s162 = sphi 0, %s160
      %s163 = sphi 0, %s162
      %s177 = sphi 0, %s163
      %s181 = sphi 0, %s181
      %s183 = sphi 0, %s181
      %s184 = sphi 0, %s183
      %s198 = sphi 0, %s184
      %s202 = sphi 0, %s202
      %s204 = sphi 0, %s202
      %s205 = sphi 0, %s204
      %s219 = sphi 0, %s205
      %s223 = sphi 0, %s223
      %s225 = sphi 0, %s223
      %s226 = sphi 0, %s225
      %s240 = sphi 0, %s226
      %s246 = sphi 0, %s248
      %s249 = sphi 0, %s246
      %s250 = sphi 0, %s249
      %s266 = sphi 0, %s250
    $region4: #{tpu_custom_call.1} parent=1 // loop_header_branch
      %24 = sbr.rel (%p22) target = $region8
    $region5: #{tpu_custom_call.1} parent=1 // loop_body
      %s26 = ssub.s32 %s21, 1
      %s27 = ssub.s32 %s21, 2
      %s34 = sadd.s32 1, %s29
      %p35 = scmp.ge.s32.totalorder %s34, 2
      %s36 = scalar_select %p35, 0, %s34
      %s37 = sadd.s32 1, %s28
      %s38 = scalar_select %p35, %s37, %s28
      %p39 = scmp.ge.s32.totalorder %s38, 1
      %s40 = scalar_select %p39, 0, %s38
      %s41 = ssub.s32 %s28, %s40
      %s42 = ssub.s32 %s29, %s36
      %s43 = sor.u32 %s41, %s42
      %p44 = scmp.eq.s32.totalorder %s43, 0
      %s46 = sadd.s32 %s45, 1
      %s47 = scalar_select %p44, %s45, %s46
      %p50 = pneg %p44
      %p51 = scmp.eq.s32.totalorder %s21, 1
      %p52 = por %p50, %p51
      %p53 = scmp.ne.s32.totalorder %s45, %s48
      %p54 = scmp.eq.s32.totalorder %s21, 0
      %p55 = por %p53, %p54
      %p56 = scmp.ne.s32.totalorder %s45, %s48
      %p57 = scmp.eq.s32.totalorder %s26, 1
      %p58 = por %p56, %p57
      %p59 = scmp.ne.s32.totalorder %s48, %s49
      %p60 = scmp.eq.s32.totalorder %s26, 0
      %p61 = por %p59, %p60
      %p62 = scmp.ne.s32.totalorder %s48, %s49
      %p63 = scmp.eq.s32.totalorder %s27, 1
      %p64 = por %p62, %p63
      %p66 = scmp.ne.s32.totalorder %s49, %s65
      %p67 = scmp.eq.s32.totalorder %s27, 0
      %p68 = por %p66, %p67
      %s69 = ssub.s32 %s28, %s40
      %s70 = ssub.s32 %s29, %s36
      %s71 = sor.u32 %s69, %s70
      %p72 = scmp.eq.s32.totalorder %s71, 0
      %s74 = sadd.s32 %s73, 1
      %s75 = scalar_select %p72, %s73, %s74
      %p78 = pneg %p72
      %p79 = scmp.eq.s32.totalorder %s21, 1
      %p80 = por %p78, %p79
      %p81 = scmp.ne.s32.totalorder %s73, %s76
      %p82 = scmp.eq.s32.totalorder %s21, 0
      %p83 = por %p81, %p82
      %p84 = scmp.ne.s32.totalorder %s73, %s76
      %p85 = scmp.eq.s32.totalorder %s26, 1
      %p86 = por %p84, %p85
      %p87 = scmp.ne.s32.totalorder %s76, %s77
      %p88 = scmp.eq.s32.totalorder %s26, 0
      %p89 = por %p87, %p88
      %p90 = scmp.ne.s32.totalorder %s76, %s77
      %p91 = scmp.eq.s32.totalorder %s27, 1
      %p92 = por %p90, %p91
      %p94 = scmp.ne.s32.totalorder %s77, %s93
      %p95 = scmp.eq.s32.totalorder %s27, 0
      %p96 = por %p94, %p95
      %s98 = sadd.s32 %s97, 1
      %p101 = scmp.eq.s32.totalorder %s21, 1
      %p102 = scmp.ne.s32.totalorder %s97, %s99
      %p103 = scmp.eq.s32.totalorder %s21, 0
      %p104 = por %p102, %p103
      %p105 = scmp.ne.s32.totalorder %s97, %s99
      %p106 = scmp.eq.s32.totalorder %s26, 1
      %p107 = por %p105, %p106
      %p108 = scmp.ne.s32.totalorder %s99, %s100
      %p109 = scmp.eq.s32.totalorder %s26, 0
      %p110 = por %p108, %p109
      %p111 = scmp.ne.s32.totalorder %s99, %s100
      %p112 = scmp.eq.s32.totalorder %s27, 1
      %p113 = por %p111, %p112
      %p115 = scmp.ne.s32.totalorder %s100, %s114
      %p116 = scmp.eq.s32.totalorder %s27, 0
      %p117 = por %p115, %p116
      %s119 = sadd.s32 %s118, 1
      %p122 = scmp.eq.s32.totalorder %s21, 1
      %p123 = scmp.ne.s32.totalorder %s118, %s120
      %p124 = scmp.eq.s32.totalorder %s21, 0
      %p125 = por %p123, %p124
      %p126 = scmp.ne.s32.totalorder %s118, %s120
      %p127 = scmp.eq.s32.totalorder %s26, 1
      %p128 = por %p126, %p127
      %p129 = scmp.ne.s32.totalorder %s120, %s121
      %p130 = scmp.eq.s32.totalorder %s26, 0
      %p131 = por %p129, %p130
      %p132 = scmp.ne.s32.totalorder %s120, %s121
      %p133 = scmp.eq.s32.totalorder %s27, 1
      %p134 = por %p132, %p133
      %p136 = scmp.ne.s32.totalorder %s121, %s135
      %p137 = scmp.eq.s32.totalorder %s27, 0
      %p138 = por %p136, %p137
      %s140 = sadd.s32 %s139, 1
      %p143 = scmp.eq.s32.totalorder %s21, 1
      %p144 = scmp.ne.s32.totalorder %s139, %s141
      %p145 = scmp.eq.s32.totalorder %s21, 0
      %p146 = por %p144, %p145
      %p147 = scmp.ne.s32.totalorder %s139, %s141
      %p148 = scmp.eq.s32.totalorder %s26, 1
      %p149 = por %p147, %p148
      %p150 = scmp.ne.s32.totalorder %s141, %s142
      %p151 = scmp.eq.s32.totalorder %s26, 0
      %p152 = por %p150, %p151
      %p153 = scmp.ne.s32.totalorder %s141, %s142
      %p154 = scmp.eq.s32.totalorder %s27, 1
      %p155 = por %p153, %p154
      %p157 = scmp.ne.s32.totalorder %s142, %s156
      %p158 = scmp.eq.s32.totalorder %s27, 0
      %p159 = por %p157, %p158
      %s161 = sadd.s32 %s160, 1
      %p164 = scmp.eq.s32.totalorder %s21, 1
      %p165 = scmp.ne.s32.totalorder %s160, %s162
      %p166 = scmp.eq.s32.totalorder %s21, 0
      %p167 = por %p165, %p166
      %p168 = scmp.ne.s32.totalorder %s160, %s162
      %p169 = scmp.eq.s32.totalorder %s26, 1
      %p170 = por %p168, %p169
      %p171 = scmp.ne.s32.totalorder %s162, %s163
      %p172 = scmp.eq.s32.totalorder %s26, 0
      %p173 = por %p171, %p172
      %p174 = scmp.ne.s32.totalorder %s162, %s163
      %p175 = scmp.eq.s32.totalorder %s27, 1
      %p176 = por %p174, %p175
      %p178 = scmp.ne.s32.totalorder %s163, %s177
      %p179 = scmp.eq.s32.totalorder %s27, 0
      %p180 = por %p178, %p179
      %s182 = sadd.s32 %s181, 1
      %p185 = scmp.eq.s32.totalorder %s21, 1
      %p186 = scmp.ne.s32.totalorder %s181, %s183
      %p187 = scmp.eq.s32.totalorder %s21, 0
      %p188 = por %p186, %p187
      %p189 = scmp.ne.s32.totalorder %s181, %s183
      %p190 = scmp.eq.s32.totalorder %s26, 1
      %p191 = por %p189, %p190
      %p192 = scmp.ne.s32.totalorder %s183, %s184
      %p193 = scmp.eq.s32.totalorder %s26, 0
      %p194 = por %p192, %p193
      %p195 = scmp.ne.s32.totalorder %s183, %s184
      %p196 = scmp.eq.s32.totalorder %s27, 1
      %p197 = por %p195, %p196
      %p199 = scmp.ne.s32.totalorder %s184, %s198
      %p200 = scmp.eq.s32.totalorder %s27, 0
      %p201 = por %p199, %p200
      %s203 = sadd.s32 %s202, 1
      %p206 = scmp.eq.s32.totalorder %s21, 1
      %p207 = scmp.ne.s32.totalorder %s202, %s204
      %p208 = scmp.eq.s32.totalorder %s21, 0
      %p209 = por %p207, %p208
      %p210 = scmp.ne.s32.totalorder %s202, %s204
      %p211 = scmp.eq.s32.totalorder %s26, 1
      %p212 = por %p210, %p211
      %p213 = scmp.ne.s32.totalorder %s204, %s205
      %p214 = scmp.eq.s32.totalorder %s26, 0
      %p215 = por %p213, %p214
      %p216 = scmp.ne.s32.totalorder %s204, %s205
      %p217 = scmp.eq.s32.totalorder %s27, 1
      %p218 = por %p216, %p217
      %p220 = scmp.ne.s32.totalorder %s205, %s219
      %p221 = scmp.eq.s32.totalorder %s27, 0
      %p222 = por %p220, %p221
      %s224 = sadd.s32 %s223, 1
      %p227 = scmp.eq.s32.totalorder %s21, 1
      %p228 = scmp.ne.s32.totalorder %s223, %s225
      %p229 = scmp.eq.s32.totalorder %s21, 0
      %p230 = por %p228, %p229
      %p231 = scmp.ne.s32.totalorder %s223, %s225
      %p232 = scmp.eq.s32.totalorder %s26, 1
      %p233 = por %p231, %p232
      %p234 = scmp.ne.s32.totalorder %s225, %s226
      %p235 = scmp.eq.s32.totalorder %s26, 0
      %p236 = por %p234, %p235
      %p237 = scmp.ne.s32.totalorder %s225, %s226
      %p238 = scmp.eq.s32.totalorder %s27, 1
      %p239 = por %p237, %p238
      %p241 = scmp.ne.s32.totalorder %s226, %s240
      %p242 = scmp.eq.s32.totalorder %s27, 0
      %p243 = por %p241, %p242
      %s244 = ssub.s32 %s28, %s40
      %p245 = scmp.eq.s32.totalorder %s244, 0
      %s247 = sadd.s32 %s246, 1
      %s248 = scalar_select %p245, %s246, %s247
      %p251 = pneg %p245
      %p252 = scmp.eq.s32.totalorder %s21, 1
      %p253 = por %p251, %p252
      %p254 = scmp.ne.s32.totalorder %s246, %s249
      %p255 = scmp.eq.s32.totalorder %s21, 0
      %p256 = por %p254, %p255
      %p257 = scmp.ne.s32.totalorder %s246, %s249
      %p258 = scmp.eq.s32.totalorder %s26, 1
      %p259 = por %p257, %p258
      %p260 = scmp.ne.s32.totalorder %s249, %s250
      %p261 = scmp.eq.s32.totalorder %s26, 0
      %p262 = por %p260, %p261
      %p263 = scmp.ne.s32.totalorder %s249, %s250
      %p264 = scmp.eq.s32.totalorder %s27, 1
      %p265 = por %p263, %p264
      %p267 = scmp.ne.s32.totalorder %s250, %s266
      %p268 = scmp.eq.s32.totalorder %s27, 0
      %p269 = por %p267, %p268
      %p270 = scmp.le.s32.totalorder 1, %s21
      %p271 = scmp.lt.s32.totalorder %s21, 3
      %p272 = pnand %p270, %p271
      %p273 = pneg %p272
      // Predicated region
      $region9: #{tpu_custom_call.1} parent=5 // pred_check
        _
      $region10: #{tpu_custom_call.1} parent=5 // pred_check_branch
        %275 = sbr.rel (%p272) target = $region12
      $region11: #{tpu_custom_call.1} parent=5 // pred_region
        %s276 = ssub.s32 %s21, 1
        // Predicated region
        $region13: #{tpu_custom_call.1} parent=11 // pred_check
          %p277 = pneg %p110
        $region14: #{tpu_custom_call.1} parent=11 // pred_check_branch
          %279 = sbr.rel (%p277) target = $region16
        $region15: #{tpu_custom_call.1} parent=11 // pred_region
          _
        $region16: #{tpu_custom_call.1} parent=11 // pred_fallthru
          _
        // Predicated region
        $region17: #{tpu_custom_call.1} parent=11 // pred_check
          %p280 = pneg %p131
        $region18: #{tpu_custom_call.1} parent=11 // pred_check_branch
          %282 = sbr.rel (%p280) target = $region20
        $region19: #{tpu_custom_call.1} parent=11 // pred_region
          _
        $region20: #{tpu_custom_call.1} parent=11 // pred_fallthru
          _
        // Predicated region
        $region21: #{tpu_custom_call.1} parent=11 // pred_check
          %p283 = pneg %p152
        $region22: #{tpu_custom_call.1} parent=11 // pred_check_branch
          %285 = sbr.rel (%p283) target = $region24
        $region23: #{tpu_custom_call.1} parent=11 // pred_region
          _
        $region24: #{tpu_custom_call.1} parent=11 // pred_fallthru
          _
        // Predicated region
        $region25: #{tpu_custom_call.1} parent=11 // pred_check
          %p286 = pneg %p173
        $region26: #{tpu_custom_call.1} parent=11 // pred_check_branch
          %288 = sbr.rel (%p286) target = $region28
        $region27: #{tpu_custom_call.1} parent=11 // pred_region
          _
        $region28: #{tpu_custom_call.1} parent=11 // pred_fallthru
          _
        // Predicated region
        $region29: #{tpu_custom_call.1} parent=11 // pred_check
          %p289 = pneg %p194
        $region30: #{tpu_custom_call.1} parent=11 // pred_check_branch
          %291 = sbr.rel (%p289) target = $region32
        $region31: #{tpu_custom_call.1} parent=11 // pred_region
          _
        $region32: #{tpu_custom_call.1} parent=11 // pred_fallthru
          _
        // Predicated region
        $region33: #{tpu_custom_call.1} parent=11 // pred_check
          %p292 = pneg %p215
        $region34: #{tpu_custom_call.1} parent=11 // pred_check_branch
          %294 = sbr.rel (%p292) target = $region36
        $region35: #{tpu_custom_call.1} parent=11 // pred_region
          _
        $region36: #{tpu_custom_call.1} parent=11 // pred_fallthru
          _
        // Predicated region
        $region37: #{tpu_custom_call.1} parent=11 // pred_check
          %p295 = pneg %p236
        $region38: #{tpu_custom_call.1} parent=11 // pred_check_branch
          %297 = sbr.rel (%p295) target = $region40
        $region39: #{tpu_custom_call.1} parent=11 // pred_region
          _
        $region40: #{tpu_custom_call.1} parent=11 // pred_fallthru
          _
      $region12: #{tpu_custom_call.1} parent=5 // pred_fallthru
        _
      %p298 = scmp.lt.s32.totalorder %s21, 2
      // Predicated region
      $region41: #{tpu_custom_call.1} parent=5 // pred_check
        %p299 = pneg %p298
      $region42: #{tpu_custom_call.1} parent=5 // pred_check_branch
        %301 = sbr.rel (%p299) target = $region44
      $region43: #{tpu_custom_call.1} parent=5 // pred_region
        // Predicated region
        $region45: #{tpu_custom_call.1} parent=43 // pred_check
          %p302 = pneg %p55
        $region46: #{tpu_custom_call.1} parent=43 // pred_check_branch
          %304 = sbr.rel (%p302) target = $region48
        $region47: #{tpu_custom_call.1} parent=43 // pred_region
          %s305 = sand.u32 %s45, 1
          %s306 = scalar_lea.sflag [#allocation7], %s305
          %s307 = sand.u32 %s45, 1
          %s308 = smul.addr %s307, 8
          %s309 = scalar_lea.vmem [#allocation6], %s308
          %s311 = ssub.s32 128, 128
          %312 = vsyncadd %s306, %s311
          %s313 = smul.addr %s28, 2
          %s314 = sadd.s32 %s29, %s313
          %s315 = smul.addr %s314, 128
          %s316 = scalar_lea.hbm %s0, %s315
          %s318 = sshll.u32 %s309, 4
          %s319 = int_to_ptr.vmem [resolvable:$true] %s318
          %321 = dma.hbm_to_vmem [thread:$0]  %s316, 128, %s319, %s306
        $region48: #{tpu_custom_call.1} parent=43 // pred_fallthru
          _
        // Predicated region
        $region49: #{tpu_custom_call.1} parent=43 // pred_check
          %p322 = pneg %p83
        $region50: #{tpu_custom_call.1} parent=43 // pred_check_branch
          %324 = sbr.rel (%p322) target = $region52
        $region51: #{tpu_custom_call.1} parent=43 // pred_region
          %s325 = sand.u32 %s73, 1
          %s326 = scalar_lea.sflag [#allocation9], %s325
          %s327 = sand.u32 %s73, 1
          %s328 = smul.addr %s327, 8
          %s329 = scalar_lea.vmem [#allocation8], %s328
          %s331 = ssub.s32 128, 128
          %332 = vsyncadd %s326, %s331
          %s333 = smul.addr %s28, 2
          %s334 = sadd.s32 %s29, %s333
          %s335 = smul.addr %s334, 128
          %s336 = scalar_lea.hbm %s1, %s335
          %s338 = sshll.u32 %s329, 4
          %s339 = int_to_ptr.vmem [resolvable:$true] %s338
          %341 = dma.hbm_to_vmem [thread:$0]  %s336, 128, %s339, %s326
        $region52: #{tpu_custom_call.1} parent=43 // pred_fallthru
          _
      $region44: #{tpu_custom_call.1} parent=5 // pred_fallthru
        _
      %p342 = scmp.le.s32.totalorder 1, %s21
      %p343 = scmp.lt.s32.totalorder %s21, 3
      %p344 = pnand %p342, %p343
      %p345 = pneg %p344
      // Predicated region
      $region53: #{tpu_custom_call.1} parent=5 // pred_check
        _
      $region54: #{tpu_custom_call.1} parent=5 // pred_check_branch
        %347 = sbr.rel (%p344) target = $region56
      $region55: #{tpu_custom_call.1} parent=5 // pred_region
        %s348 = ssub.s32 %s21, 1
        %s349 = sand.u32 %s48, 1
        %s350 = scalar_lea.sflag [#allocation7], %s349
        %s351 = sand.u32 %s48, 1
        %s352 = smul.addr %s351, 8
        %s353 = scalar_lea.vmem [#allocation6], %s352
        // Predicated region
        $region57: #{tpu_custom_call.1} parent=55 // pred_check
          %p354 = pneg %p61
        $region58: #{tpu_custom_call.1} parent=55 // pred_check_branch
          %356 = sbr.rel (%p354) target = $region60
        $region59: #{tpu_custom_call.1} parent=55 // pred_region
          %357 = dma.done %s350, 128
        $region60: #{tpu_custom_call.1} parent=55 // pred_fallthru
          _
        %s358 = sand.u32 %s76, 1
        %s359 = scalar_lea.sflag [#allocation9], %s358
        %s360 = sand.u32 %s76, 1
        %s361 = smul.addr %s360, 8
        %s362 = scalar_lea.vmem [#allocation8], %s361
        // Predicated region
        $region61: #{tpu_custom_call.1} parent=55 // pred_check
          %p363 = pneg %p89
        $region62: #{tpu_custom_call.1} parent=55 // pred_check_branch
          %365 = sbr.rel (%p363) target = $region64
        $region63: #{tpu_custom_call.1} parent=55 // pred_region
          %366 = dma.done %s359, 128
        $region64: #{tpu_custom_call.1} parent=55 // pred_fallthru
          _
        %s367 = sand.u32 %s48, 1
        %s368 = scalar_lea.sflag [#allocation7], %s367
        %s369 = sand.u32 %s48, 1
        %s370 = smul.addr %s369, 8
        %s371 = scalar_lea.vmem [#allocation6], %s370
        %p372 = pneg %p61
        %p373 = pneg %p58
        %s374 = sand.u32 %s76, 1
        %s375 = scalar_lea.sflag [#allocation9], %s374
        %s376 = sand.u32 %s76, 1
        %s377 = smul.addr %s376, 8
        %s378 = scalar_lea.vmem [#allocation8], %s377
        %p379 = pneg %p89
        %p380 = pneg %p86
        %p381 = pneg %p110
        %p382 = pneg %p107
        %p383 = pneg %p131
        %p384 = pneg %p128
        %p385 = pneg %p152
        %p386 = pneg %p149
        %p387 = pneg %p173
        %p388 = pneg %p170
        %p389 = pneg %p194
        %p390 = pneg %p191
        %p391 = pneg %p215
        %p392 = pneg %p212
        %p393 = pneg %p236
        %p394 = pneg %p233
        %p395 = pneg %p262
        %p396 = pneg %p259
        %s397 = smul.u32 2, %s30
        %p398 = scmp.lt.s32.totalorder %s397, 1
        %s399 = scalar_select %p398, %s397, 1
        %s400 = smul.addr %s399, 8
        %s401 = scalar_lea.vmem %s9, %s400
        %s402 = smul.u32 2, %s30
        %p403 = scmp.lt.s32.totalorder %s402, 1
        %s404 = scalar_select %p403, %s402, 1
        %s405 = smul.addr %s404, 8
        %s406 = scalar_lea.vmem %s9, %s405
        %s407 = smul.u32 2, %s30
        %v408 = vld [vmem:[%s353] sm:$0xff]
        %v409 = vld [vmem:[%s362] sm:$0xff]
        %410 = vadd.xlane.f32.xlu0 %v408
        %v411 = vpop.xlane.xlu0 %410
        %412 = vadd.xlane.f32.xlu0 %v409
        %v413 = vpop.xlane.xlu0 %412
        %414 = vmax.xlane.f32.xlu0 %v408
        %v415 = vpop.xlane.xlu0 %414
        %416 = vmax.xlane.f32.xlu0 %v409
        %v417 = vpop.xlane.xlu0 %416
        %p418 = scmp.eq.s32.totalorder %s31, 0
        // Predicated region
        $region65: #{tpu_custom_call.1} parent=55 // pred_check
          %p419 = pneg %p418
        $region66: #{tpu_custom_call.1} parent=55 // pred_check_branch
          %421 = sbr.rel (%p419) target = $region68
        $region67: #{tpu_custom_call.1} parent=55 // pred_region
          %vm422 = vcmask 7168
          %423 = vst.msk [vmem:[#allocation2] sm:$0xff] %vm422, %v411
          %424 = vst.msk [vmem:[#allocation3] sm:$0xff] %vm422, %v413
          %425 = vst.msk [vmem:[#allocation4] sm:$0xff] %vm422, %v415
          %426 = vst.msk [vmem:[#allocation5] sm:$0xff] %vm422, %v417
        $region68: #{tpu_custom_call.1} parent=55 // pred_fallthru
          _
        %p427 = scmp.gt.s32.totalorder %s31, 0
        // Predicated region
        $region69: #{tpu_custom_call.1} parent=55 // pred_check
          %p428 = pneg %p427
        $region70: #{tpu_custom_call.1} parent=55 // pred_check_branch
          %430 = sbr.rel (%p428) target = $region72
        $region71: #{tpu_custom_call.1} parent=55 // pred_region
          %v431 = vld [vmem:[#allocation2] sm:$0xff]
          %v432 = vadd.f32 %v431, %v411
          %vm433 = vcmask 7168
          %434 = vst.msk [vmem:[#allocation2] sm:$0xff] %vm433, %v432
          %v435 = vld [vmem:[#allocation3] sm:$0xff]
          %v436 = vadd.f32 %v435, %v413
          %437 = vst.msk [vmem:[#allocation3] sm:$0xff] %vm433, %v436
          %v438 = vld [vmem:[#allocation4] sm:$0xff]
          %v439 = vmax.f32 %v438, %v415
          %440 = vst.msk [vmem:[#allocation4] sm:$0xff] %vm433, %v439
          %v441 = vld [vmem:[#allocation5] sm:$0xff]
          %v442 = vmax.f32 %v441, %v417
          %443 = vst.msk [vmem:[#allocation5] sm:$0xff] %vm433, %v442
        $region72: #{tpu_custom_call.1} parent=55 // pred_fallthru
          _
        %p444 = scmp.eq.s32.totalorder %s31, 1
        // Predicated region
        $region73: #{tpu_custom_call.1} parent=55 // pred_check
          %p445 = pneg %p444
        $region74: #{tpu_custom_call.1} parent=55 // pred_check_branch
          %447 = sbr.rel (%p445) target = $region76
        $region75: #{tpu_custom_call.1} parent=55 // pred_region
          %v448 = vld [vmem:[%s2] sm:$0xf]
          %v449 = vld [vmem:[%s3] sm:$0xf]
          %v450 = vld [vmem:[%s4] sm:$0xf]
          %v451 = vld [vmem:[%s5] sm:$0xf]
          %v452 = vld [vmem:[%s6] sm:$0x1]
          %v453 = vld [vmem:[%s7] sm:$0xff]
          %v454 = vld [vmem:[%s8] sm:$0xff]
          %v455 = vld [vmem:[#allocation2] sm:$0xf]
          %v456 = vmul.f32 %v455, 0.00390625
          %v457 = vld [vmem:[#allocation3] sm:$0xf]
          %v458 = vmul.f32 %v457, 0.00390625
          %v459 = vld [vmem:[#allocation4] sm:$0xf]
          %v460 = vld [vmem:[#allocation5] sm:$0xf]
          %462 = vset.pattern.permute.xlu0 0
          %463 = vperm.xlu0 %462, %v456
          %v464 = vpop.permute.xlu0 %463
          %v466 = vmul.f32 %v464, %v448
          %468 = vset.pattern.permute.xlu0 0
          %469 = vperm.xlu0 %468, %v458
          %v470 = vpop.permute.xlu0 %469
          %v472 = vmul.f32 %v470, %v449
          %v473 = vadd.f32 %v466, %v472
          %475 = vset.pattern.permute.xlu0 0
          %476 = vperm.xlu0 %475, %v459
          %v477 = vpop.permute.xlu0 %476
          %v479 = vmul.f32 %v477, %v450
          %v480 = vadd.f32 %v473, %v479
          %482 = vset.pattern.permute.xlu0 0
          %483 = vperm.xlu0 %482, %v460
          %v484 = vpop.permute.xlu0 %483
          %v486 = vmul.f32 %v484, %v451
          %v487 = vadd.f32 %v480, %v486
          %vm488 = vcmask 125952
          %v489 = vsel %vm488, %v487, 0.0
          %v490 = vrot.slane %v489, 4
          %v491 = vadd.f32 %v489, %v490
          %v492 = vrot.slane %v491, 2
          %v493 = vadd.f32 %v491, %v492
          %v494 = vrot.slane %v493, 1
          %v495 = vadd.f32 %v493, %v494
          %v496 = vadd.f32 %v495, %v452
          %v497 = vmax.f32 %v496, 0.0
          %v498 = vlaneseq
          %v499 = vshrl.u32 %v498, 7
          %v500 = vsub.s32 0, %v499
          %v501 = vrot.slane %v497, %v500
          %v502 = vmul.f32 %v501, %v453
          %vm503 = vcmask 130048
          %v504 = vsel %vm503, %v502, 0.0
          %505 = vadd.xlane.f32.xlu0 %v504
          %v506 = vpop.xlane.xlu0 %505
          %v507 = vadd.f32 %v506, %v454
          %v508 = vxor.u32 %v507, 2147483648
          %v509 = vmul.f32 %v508, 1.442695
          %v510 = vpow.pop %v509
          %v511 = vadd.f32 %v510, 1.0
          %v512 = vrcp.pop %v511
          %v513 = vmul.f32 1.0, %v512
          %vm514 = vcmask 7168
          %515 = vst.msk [vmem:[%s406] sm:$0xff] %vm514, %v513
          %v516 = vld [vmem:[#allocation2 + $0x4] sm:$0xf]
          %v517 = vmul.f32 %v516, 0.00390625
          %v518 = vld [vmem:[#allocation3 + $0x4] sm:$0xf]
          %v519 = vmul.f32 %v518, 0.00390625
          %v520 = vld [vmem:[#allocation4 + $0x4] sm:$0xf]
          %v521 = vld [vmem:[#allocation5 + $0x4] sm:$0xf]
          %523 = vset.pattern.permute.xlu0 0
          %524 = vperm.xlu0 %523, %v517
          %v525 = vpop.permute.xlu0 %524
          %v527 = vmul.f32 %v525, %v448
          %529 = vset.pattern.permute.xlu0 0
          %530 = vperm.xlu0 %529, %v519
          %v531 = vpop.permute.xlu0 %530
          %v533 = vmul.f32 %v531, %v449
          %v534 = vadd.f32 %v527, %v533
          %536 = vset.pattern.permute.xlu0 0
          %537 = vperm.xlu0 %536, %v520
          %v538 = vpop.permute.xlu0 %537
          %v540 = vmul.f32 %v538, %v450
          %v541 = vadd.f32 %v534, %v540
          %543 = vset.pattern.permute.xlu0 0
          %544 = vperm.xlu0 %543, %v521
          %v545 = vpop.permute.xlu0 %544
          %v547 = vmul.f32 %v545, %v451
          %v548 = vadd.f32 %v541, %v547
          %v549 = vsel %vm488, %v548, 0.0
          %v550 = vrot.slane %v549, 4
          %v551 = vadd.f32 %v549, %v550
          %v552 = vrot.slane %v551, 2
          %v553 = vadd.f32 %v551, %v552
          %v554 = vrot.slane %v553, 1
          %v555 = vadd.f32 %v553, %v554
          %v556 = vadd.f32 %v555, %v452
          %v557 = vmax.f32 %v556, 0.0
          %v558 = vlaneseq
          %v559 = vshrl.u32 %v558, 7
          %v560 = vsub.s32 0, %v559
          %v561 = vrot.slane %v557, %v560
          %v562 = vmul.f32 %v561, %v453
          %v563 = vsel %vm503, %v562, 0.0
          %564 = vadd.xlane.f32.xlu0 %v563
          %v565 = vpop.xlane.xlu0 %564
          %v566 = vadd.f32 %v565, %v454
          %v567 = vxor.u32 %v566, 2147483648
          %v568 = vmul.f32 %v567, 1.442695
          %v569 = vpow.pop %v568
          %v570 = vadd.f32 %v569, 1.0
          %v571 = vrcp.pop %v570
          %v572 = vmul.f32 1.0, %v571
          %s573 = scalar_lea.vmem %s406, 8
          %574 = vst.msk [vmem:[%s573] sm:$0xff] %vm514, %v572
        $region76: #{tpu_custom_call.1} parent=55 // pred_fallthru
          _
        %s575 = smul.u32 2, %s30
        %p576 = scmp.lt.s32.totalorder %s575, 1
        %s577 = scalar_select %p576, %s575, 1
        %s578 = smul.addr %s577, 8
        %s579 = scalar_lea.vmem %s9, %s578
        // Predicated region
        $region77: #{tpu_custom_call.1} parent=55 // pred_check
          %p580 = pneg %p259
        $region78: #{tpu_custom_call.1} parent=55 // pred_check_branch
          %582 = sbr.rel (%p580) target = $region80
        $region79: #{tpu_custom_call.1} parent=55 // pred_region
          %s583 = smul.u32 2, %s30
        $region80: #{tpu_custom_call.1} parent=55 // pred_fallthru
          _
        // Predicated region
        $region81: #{tpu_custom_call.1} parent=55 // pred_check
          %p584 = pneg %p259
        $region82: #{tpu_custom_call.1} parent=55 // pred_check_branch
          %586 = sbr.rel (%p584) target = $region84
        $region83: #{tpu_custom_call.1} parent=55 // pred_region
          %s587 = smul.u32 2, %s30
          %p588 = scmp.lt.s32.totalorder %s587, 1
          %s589 = scalar_select %p588, %s587, 1
          %s590 = smul.addr %s589, 8
          %s591 = scalar_lea.vmem %s9, %s590
        $region84: #{tpu_custom_call.1} parent=55 // pred_fallthru
          _
      $region56: #{tpu_custom_call.1} parent=5 // pred_fallthru
        _
      %p592 = scmp.le.s32.totalorder 2, %s21
      // Predicated region
      $region85: #{tpu_custom_call.1} parent=5 // pred_check
        %p593 = pneg %p592
      $region86: #{tpu_custom_call.1} parent=5 // pred_check_branch
        %595 = sbr.rel (%p593) target = $region88
      $region87: #{tpu_custom_call.1} parent=5 // pred_region
        %s596 = ssub.s32 %s21, 2
      $region88: #{tpu_custom_call.1} parent=5 // pred_fallthru
        _
    $region6: #{tpu_custom_call.1} parent=1 // loop_footer
      %s25 = sadd.s32 1, %s21
    $region7: #{tpu_custom_call.1} parent=1 // loop_footer_branch
      %20 = sbr.rel target = $region3
    $region8: #{tpu_custom_call.1} parent=1 // loop_exit
      _
    %597 = vsyncpa [#allocation7], 1
    %s598 = scalar_lea.sflag [#allocation7], 1
    %599 = vsyncpa %s598, 1
    %600 = vsyncpa [#allocation9], 1
    %s601 = scalar_lea.sflag [#allocation9], 1
    %602 = vsyncpa %s601, 1

</llo_original>
